<compile_context>
chip_gen: v7x
topology: tpu7x:2x2x1
jax: 0.10.0
libtpu: 0.0.40
codegen_flags: <defaults>
</compile_context>

<pallas_src>
import jax
import jax.numpy as jnp
from jax.experimental import pallas as pl
from jax.experimental.pallas import tpu as pltpu


def _round_up(x, m):
    return ((x + m - 1) // m) * m


def _choose_tb(b_pad, tb_cap, min_grid=2):
    """Largest 128-multiple divisor of b_pad that is <= tb_cap, preferring a
    choice that leaves the grid with >= min_grid steps (v7x dual-TC sharding)."""
    n = b_pad // 128
    cands = [128 * d for d in range(1, n + 1) if n % d == 0 and 128 * d <= tb_cap]
    if not cands:
        return 128
    pref = [t for t in cands if b_pad // t >= min_grid]
    return max(pref) if pref else max(cands)


# ----------------------------------------------------------------------------
# Kernel: one batch tile (TB rows) of the full 3-layer MLP.
#   obs_ref : (TB, obs_dim) bf16       w1o_ref : (obs_dim, H) bf16
#   act_ref : (TB, act_dim) bf16       w1a_ref : (act_dim, H) bf16
#   b1_ref  : (1, H) f32               w2_ref  : (H, H)       bf16
#   b2_ref  : (1, H) f32               w3_ref  : (H, 1)       bf16
#   b3_ref  : (1, 1) f32               o_ref   : (TB, 1)      f32
# ----------------------------------------------------------------------------
def qmlp_kernel(obs_ref, act_ref, w1o_ref, w1a_ref, b1_ref,
                w2_ref, b2_ref, w3_ref, b3_ref, o_ref):
    # Layer 1: Linear(D -> H) + ReLU, concat fused as two matmuls (w1 split by
    # input rows). bf16 MXU operands, f32 accumulate + elementwise.
    h1 = jnp.dot(obs_ref[...], w1o_ref[...], preferred_element_type=jnp.float32)
    h1 = h1 + jnp.dot(act_ref[...], w1a_ref[...],
                      preferred_element_type=jnp.float32)
    h1 = jnp.maximum(h1 + b1_ref[...], 0.0)                    # (TB, H) f32

    # Layer 2: Linear(H -> H) + ReLU.
    h2 = jnp.dot(h1.astype(jnp.bfloat16), w2_ref[...],
                 preferred_element_type=jnp.float32)
    h2 = jnp.maximum(h2 + b2_ref[...], 0.0)                    # (TB, H) f32

    # Layer 3: Linear(H -> 1) + Sigmoid. Column output (no activation-tile
    # transpose); the (TB,1) masked store is only TB*4 bytes per step.
    q = jnp.dot(h2.astype(jnp.bfloat16), w3_ref[...],
                preferred_element_type=jnp.float32)            # (TB, 1)
    o_ref[...] = jax.nn.sigmoid(q + b3_ref[...])


# ----------------------------------------------------------------------------
# One-time conversion from "natural" (torch-like, transposed) f32 params to the
# kernel layout: w1 split by input rows, MXU weights in bf16, biases f32.
# ----------------------------------------------------------------------------
def prepare_kernel_params(params, obs_dim):
    return {
        "w1_obs": params["w1"][:obs_dim].astype(jnp.bfloat16),   # (obs_dim, H)
        "w1_act": params["w1"][obs_dim:].astype(jnp.bfloat16),   # (act_dim, H)
        "b1": params["b1"].astype(jnp.float32),                  # (1, H)
        "w2": params["w2"].astype(jnp.bfloat16),                 # (H, H)
        "b2": params["b2"].astype(jnp.float32),                  # (1, H)
        "w3": params["w3"].astype(jnp.bfloat16),                 # (H, 1)
        "b3": params["b3"].reshape(1, 1).astype(jnp.float32),    # (1, 1)
    }


def qmlp_forward(obs, act, kp, *, tb_max=8192, vmem_budget_bytes=24 << 20):
    """Pallas implementation of qMLP.forward. Returns shape (B,) float32."""
    # Stream activations as bf16 (no-op if the caller already keeps them bf16);
    # all accumulation stays f32 inside the kernel.
    obs = obs.astype(jnp.bfloat16)
    act = act.astype(jnp.bfloat16)
    B, obs_dim = obs.shape
    act_dim = act.shape[1]
    H = kp["w2"].shape[0]
    D = obs_dim + act_dim

    # Pad the batch only up to the next multiple of 128 (layout rule), never to
    # a multiple of TB — at most 127 extra rows.
    B_pad = _round_up(B, 128)
    if B_pad != B:
        obs = jnp.pad(obs, ((0, B_pad - B), (0, 0)))
        act = jnp.pad(act, ((0, B_pad - B), (0, 0)))

    # VMEM-aware batch tile: per-row footprint = double-buffered bf16 inputs
    # (2*D*2 B) + f32/bf16 hidden temporaries (~16*H B) + double-buffered f32
    # output (8 B); weights/biases are resident (double-buffered by default).
    weight_bytes = 2 * (2 * (D * H + H * H + H) + 4 * (2 * H + 1))
    per_row = 2 * D * 2 + 16 * H + 8
    tb_cap = max(128, min(tb_max, (vmem_budget_bytes - weight_bytes) // per_row))
    tb_cap = max(128, (tb_cap // 128) * 128)
    TB = _choose_tb(B_pad, tb_cap, min_grid=2)
    grid = (B_pad // TB,)

    flops = 2 * B_pad * (D * H + H * H + H)
    bytes_accessed = (B_pad * D * 2 + B_pad * 4            # bf16 batch in, f32 out
                      + 2 * (D * H + H * H + H)            # bf16 weights
                      + 4 * (2 * H + 1))                   # f32 biases
    cost = pl.CostEstimate(flops=flops, transcendentals=2 * B_pad,
                           bytes_accessed=bytes_accessed)

    # Weights/biases: same block every step -> DMA'd once, VMEM-resident.
    # (For large H, add pipeline_mode=pl.Buffered(1) here to single-buffer them.)
    const = lambda i: (0, 0)

    out = pl.pallas_call(
        qmlp_kernel,
        out_shape=jax.ShapeDtypeStruct((B_pad, 1), jnp.float32),
        grid=grid,
        in_specs=[
            pl.BlockSpec((TB, obs_dim), lambda i: (i, 0)),
            pl.BlockSpec((TB, act_dim), lambda i: (i, 0)),
            pl.BlockSpec((obs_dim, H), const),
            pl.BlockSpec((act_dim, H), const),
            pl.BlockSpec((1, H), const),
            pl.BlockSpec((H, H), const),
            pl.BlockSpec((1, H), const),
            pl.BlockSpec((H, 1), const),
            pl.BlockSpec((1, 1), const),
        ],
        out_specs=pl.BlockSpec((TB, 1), lambda i: (i, 0)),
        compiler_params=pltpu.CompilerParams(
            dimension_semantics=("parallel",)),
        cost_estimate=cost,
    )(obs, act, kp["w1_obs"], kp["w1_act"], kp["b1"],
      kp["w2"], kp["b2"], kp["w3"], kp["b3"])

    return out[:B, 0]   # (B,) == torch .squeeze(-1)


# ----------------------------------------------------------------------------
# Deterministic parameter init (xavier_uniform with relu gain, zero bias —
# mirroring qMLP._init_weights).  Weights are (in, out), i.e. torch weight.T.
# ----------------------------------------------------------------------------
def init_params(key, obs_dim, act_dim, hidden_size):
    D = obs_dim + act_dim
    H = hidden_size
    gain = jnp.sqrt(2.0)  # nn.init.calculate_gain('relu')

    def xavier(k, fan_in, fan_out):
        bound = gain * jnp.sqrt(6.0 / (fan_in + fan_out))
        return jax.random.uniform(k, (fan_in, fan_out), jnp.float32,
                                  minval=-bound, maxval=bound)

    k1, k2, k3 = jax.random.split(key, 3)
    return {
        "w1": xavier(k1, D, H), "b1": jnp.zeros((1, H), jnp.float32),
        "w2": xavier(k2, H, H), "b2": jnp.zeros((1, H), jnp.float32),
        "w3": xavier(k3, H, 1), "b3": jnp.zeros((1, 1), jnp.float32),
    }


# Pure-JAX f32 reference for a correctness check.
def qmlp_ref(obs, act, p):
    x = jnp.concatenate([obs, act], axis=-1).astype(jnp.float32)
    h1 = jnp.maximum(x @ p["w1"] + p["b1"], 0.0)
    h2 = jnp.maximum(h1 @ p["w2"] + p["b2"], 0.0)
    return jax.nn.sigmoid(h2 @ p["w3"] + p["b3"])[:, 0]


if __name__ == "__main__":
    obs_dim, act_dim, hidden_size = 10, 6, 32
    batch = 8

    key = jax.random.PRNGKey(0)
    k_obs, k_act, k_par = jax.random.split(key, 3)

    obs = jax.random.normal(k_obs, (batch, obs_dim), jnp.float32)
    act = jax.random.normal(k_act, (batch, act_dim), jnp.float32)
    params = init_params(k_par, obs_dim, act_dim, hidden_size)
    kparams = prepare_kernel_params(params, obs_dim)

    q = qmlp_forward(obs, act, kparams)
    q = jax.block_until_ready(q)

    q_ref = qmlp_ref(obs, act, params)
    assert q.shape == (batch,), q.shape
    # bf16 streamed inputs + bf16 MXU weights (f32 accumulate) vs f32 reference
    # -> compare with a correspondingly wider tolerance.
    assert jnp.allclose(q, q_ref, atol=3e-2, rtol=0), (q, q_ref)

    print("KERNEL_OK")
</pallas_src>

<mosaic_0001>
module attributes {stable_mosaic.version = 11 : i64} {
  func.func @qmlp_kernel(%arg0: i32, %arg1: memref<128x10xbf16, #tpu.memory_space<vmem>>, %arg2: memref<128x6xbf16, #tpu.memory_space<vmem>>, %arg3: memref<10x32xbf16, #tpu.memory_space<vmem>>, %arg4: memref<6x32xbf16, #tpu.memory_space<vmem>>, %arg5: memref<1x32xf32, #tpu.memory_space<vmem>>, %arg6: memref<32x32xbf16, #tpu.memory_space<vmem>>, %arg7: memref<1x32xf32, #tpu.memory_space<vmem>>, %arg8: memref<32x1xbf16, #tpu.memory_space<vmem>>, %arg9: memref<1x1xf32, #tpu.memory_space<vmem>>, %arg10: memref<128x1xf32, #tpu.memory_space<vmem>>) attributes {dimension_semantics = [#tpu.dimension_semantics<parallel>], iteration_bounds = array<i64: 1>, scalar_prefetch = 0 : i64, scratch_operands = 0 : i64, tpu.core_type = #tpu.core_type<tc>, window_params = [{transform_indices = @transform_0, window_bounds = array<i64: 128, 10>}, {transform_indices = @transform_1, window_bounds = array<i64: 128, 6>}, {pipeline_mode = #tpu.pipeline_mode<synchronous>, transform_indices = @transform_2, window_bounds = array<i64: 10, 32>}, {pipeline_mode = #tpu.pipeline_mode<synchronous>, transform_indices = @transform_3, window_bounds = array<i64: 6, 32>}, {pipeline_mode = #tpu.pipeline_mode<synchronous>, transform_indices = @transform_4, window_bounds = array<i64: 1, 32>}, {pipeline_mode = #tpu.pipeline_mode<synchronous>, transform_indices = @transform_5, window_bounds = array<i64: 32, 32>}, {pipeline_mode = #tpu.pipeline_mode<synchronous>, transform_indices = @transform_6, window_bounds = array<i64: 1, 32>}, {pipeline_mode = #tpu.pipeline_mode<synchronous>, transform_indices = @transform_7, window_bounds = array<i64: 32, 1>}, {pipeline_mode = #tpu.pipeline_mode<synchronous>, transform_indices = @transform_8, window_bounds = array<i64: 1, 1>}, {transform_indices = @transform_9, window_bounds = array<i64: 128, 1>}]} {
    %c0 = arith.constant 0 : index
    %c0_0 = arith.constant 0 : index
    %0 = vector.load %arg1[%c0, %c0_0] : memref<128x10xbf16, #tpu.memory_space<vmem>>, vector<128x10xbf16>
    %c0_1 = arith.constant 0 : index
    %c0_2 = arith.constant 0 : index
    %1 = vector.load %arg3[%c0_1, %c0_2] : memref<10x32xbf16, #tpu.memory_space<vmem>>, vector<10x32xbf16>
    %cst = arith.constant dense<0.000000e+00> : vector<128x32xf32>
    %2 = tpu.matmul %0, %1, %cst {dimension_numbers = #tpu.dot_dimension_numbers<[1], [0], [0], [1], [0, 0, 1, 1], [], []>} : vector<128x10xbf16>, vector<10x32xbf16>, vector<128x32xf32> -> vector<128x32xf32>
    %c0_3 = arith.constant 0 : index
    %c0_4 = arith.constant 0 : index
    %3 = vector.load %arg2[%c0_3, %c0_4] : memref<128x6xbf16, #tpu.memory_space<vmem>>, vector<128x6xbf16>
    %c0_5 = arith.constant 0 : index
    %c0_6 = arith.constant 0 : index
    %4 = vector.load %arg4[%c0_5, %c0_6] : memref<6x32xbf16, #tpu.memory_space<vmem>>, vector<6x32xbf16>
    %cst_7 = arith.constant dense<0.000000e+00> : vector<128x32xf32>
    %5 = tpu.matmul %3, %4, %cst_7 {dimension_numbers = #tpu.dot_dimension_numbers<[1], [0], [0], [1], [0, 0, 1, 1], [], []>} : vector<128x6xbf16>, vector<6x32xbf16>, vector<128x32xf32> -> vector<128x32xf32>
    %6 = arith.addf %2, %5 : vector<128x32xf32>
    %c0_8 = arith.constant 0 : index
    %c0_9 = arith.constant 0 : index
    %7 = vector.load %arg5[%c0_8, %c0_9] : memref<1x32xf32, #tpu.memory_space<vmem>>, vector<1x32xf32>
    %8 = vector.broadcast %7 : vector<1x32xf32> to vector<128x32xf32>
    %9 = arith.addf %6, %8 : vector<128x32xf32>
    %cst_10 = arith.constant 0.000000e+00 : f32
    %10 = vector.broadcast %cst_10 : f32 to vector<128x32xf32>
    %11 = arith.maximumf %9, %10 : vector<128x32xf32>
    %12 = arith.truncf %11 : vector<128x32xf32> to vector<128x32xbf16>
    %c0_11 = arith.constant 0 : index
    %c0_12 = arith.constant 0 : index
    %13 = vector.load %arg6[%c0_11, %c0_12] : memref<32x32xbf16, #tpu.memory_space<vmem>>, vector<32x32xbf16>
    %cst_13 = arith.constant dense<0.000000e+00> : vector<128x32xf32>
    %14 = tpu.matmul %12, %13, %cst_13 {dimension_numbers = #tpu.dot_dimension_numbers<[1], [0], [0], [1], [0, 0, 1, 1], [], []>} : vector<128x32xbf16>, vector<32x32xbf16>, vector<128x32xf32> -> vector<128x32xf32>
    %c0_14 = arith.constant 0 : index
    %c0_15 = arith.constant 0 : index
    %15 = vector.load %arg7[%c0_14, %c0_15] : memref<1x32xf32, #tpu.memory_space<vmem>>, vector<1x32xf32>
    %16 = vector.broadcast %15 : vector<1x32xf32> to vector<128x32xf32>
    %17 = arith.addf %14, %16 : vector<128x32xf32>
    %cst_16 = arith.constant 0.000000e+00 : f32
    %18 = vector.broadcast %cst_16 : f32 to vector<128x32xf32>
    %19 = arith.maximumf %17, %18 : vector<128x32xf32>
    %20 = arith.truncf %19 : vector<128x32xf32> to vector<128x32xbf16>
    %c0_17 = arith.constant 0 : index
    %c0_18 = arith.constant 0 : index
    %21 = vector.load %arg8[%c0_17, %c0_18] : memref<32x1xbf16, #tpu.memory_space<vmem>>, vector<32x1xbf16>
    %cst_19 = arith.constant dense<0.000000e+00> : vector<128x1xf32>
    %22 = tpu.matmul %20, %21, %cst_19 {dimension_numbers = #tpu.dot_dimension_numbers<[1], [0], [0], [1], [0, 0, 1, 1], [], []>} : vector<128x32xbf16>, vector<32x1xbf16>, vector<128x1xf32> -> vector<128x1xf32>
    %c0_20 = arith.constant 0 : index
    %c0_21 = arith.constant 0 : index
    %23 = vector.load %arg9[%c0_20, %c0_21] : memref<1x1xf32, #tpu.memory_space<vmem>>, vector<1x1xf32>
    %24 = vector.broadcast %23 : vector<1x1xf32> to vector<128x1xf32>
    %25 = arith.addf %22, %24 : vector<128x1xf32>
    %26 = arith.negf %25 : vector<128x1xf32>
    %27 = math.exp %26 : vector<128x1xf32>
    %cst_22 = arith.constant 1.000000e+00 : f32
    %28 = vector.broadcast %cst_22 : f32 to vector<128x1xf32>
    %29 = arith.addf %28, %27 : vector<128x1xf32>
    %30 = arith.divf %28, %29 : vector<128x1xf32>
    %c0_23 = arith.constant 0 : index
    %c0_24 = arith.constant 0 : index
    %31 = vector.load %arg10[%c0_23, %c0_24] : memref<128x1xf32, #tpu.memory_space<vmem>>, vector<128x1xf32>
    tpu.vector_store %arg10[%c0_23, %c0_24], %30 {strides = array<i32>} : memref<128x1xf32, #tpu.memory_space<vmem>>, vector<128x1xf32>,
    return
  }
  func.func @transform_0(%arg0: i32) -> (i32, i32) {
    %c0_i32 = arith.constant 0 : i32
    %c0_i32_0 = arith.constant 0 : i32
    return %arg0, %c0_i32 : i32, i32
  }
  func.func @transform_1(%arg0: i32) -> (i32, i32) {
    %c0_i32 = arith.constant 0 : i32
    %c0_i32_0 = arith.constant 0 : i32
    return %arg0, %c0_i32 : i32, i32
  }
  func.func @transform_2(%arg0: i32) -> (i32, i32) {
    %c0_i32 = arith.constant 0 : i32
    %c0_i32_0 = arith.constant 0 : i32
    %c0_i32_1 = arith.constant 0 : i32
    return %c0_i32, %c0_i32_0 : i32, i32
  }
  func.func @transform_3(%arg0: i32) -> (i32, i32) {
    %c0_i32 = arith.constant 0 : i32
    %c0_i32_0 = arith.constant 0 : i32
    %c0_i32_1 = arith.constant 0 : i32
    return %c0_i32, %c0_i32_0 : i32, i32
  }
  func.func @transform_4(%arg0: i32) -> (i32, i32) {
    %c0_i32 = arith.constant 0 : i32
    %c0_i32_0 = arith.constant 0 : i32
    %c0_i32_1 = arith.constant 0 : i32
    return %c0_i32, %c0_i32_0 : i32, i32
  }
  func.func @transform_5(%arg0: i32) -> (i32, i32) {
    %c0_i32 = arith.constant 0 : i32
    %c0_i32_0 = arith.constant 0 : i32
    %c0_i32_1 = arith.constant 0 : i32
    return %c0_i32, %c0_i32_0 : i32, i32
  }
  func.func @transform_6(%arg0: i32) -> (i32, i32) {
    %c0_i32 = arith.constant 0 : i32
    %c0_i32_0 = arith.constant 0 : i32
    %c0_i32_1 = arith.constant 0 : i32
    return %c0_i32, %c0_i32_0 : i32, i32
  }
  func.func @transform_7(%arg0: i32) -> (i32, i32) {
    %c0_i32 = arith.constant 0 : i32
    %c0_i32_0 = arith.constant 0 : i32
    %c0_i32_1 = arith.constant 0 : i32
    return %c0_i32, %c0_i32_0 : i32, i32
  }
  func.func @transform_8(%arg0: i32) -> (i32, i32) {
    %c0_i32 = arith.constant 0 : i32
    %c0_i32_0 = arith.constant 0 : i32
    %c0_i32_1 = arith.constant 0 : i32
    return %c0_i32, %c0_i32_0 : i32, i32
  }
  func.func @transform_9(%arg0: i32) -> (i32, i32) {
    %c0_i32 = arith.constant 0 : i32
    %c0_i32_0 = arith.constant 0 : i32
    return %arg0, %c0_i32 : i32, i32
  }
}

</mosaic_0001>

<llo_original>
// kernel: tpu_custom_call.1
$region0: #{tpu_custom_call.1}
  #allocation0 [shape = 'u32[]', space=smem, size = 0x4, offset = 0x4, fixed_abs, tag = 'smem constant byte address 0x4 - core index']
  #allocation1 [shape = 'u32[144,128]{1,0:T(1,128)}', space=vmem, size = 0x12000, scoped, tag = 'internal scratch']
  #allocation2 [shape = 'f32[1,1]{1,0:T(1,128)S(1)}', space=vmem, size = 0x200, scoped, tag = 'scoped memory for tpu_custom_call.1']
  %s0 = inlined_call_operand.vmem [shape: bf16[128,10], index: 0, kind: input, shape index: {}]
  %s1 = inlined_call_operand.vmem [shape: bf16[128,6], index: 1, kind: input, shape index: {}]
  %s2 = inlined_call_operand.vmem [shape: bf16[10,32], index: 2, kind: input, shape index: {}]
  %s3 = inlined_call_operand.vmem [shape: bf16[6,32], index: 3, kind: input, shape index: {}]
  %s4 = inlined_call_operand.vmem [shape: f32[1,32], index: 4, kind: input, shape index: {}]
  %s5 = inlined_call_operand.vmem [shape: bf16[32,32], index: 5, kind: input, shape index: {}]
  %s6 = inlined_call_operand.vmem [shape: f32[1,32], index: 6, kind: input, shape index: {}]
  %s7 = inlined_call_operand.vmem [shape: bf16[32,1], index: 7, kind: input, shape index: {}]
  %s8 = inlined_call_operand.<no memory space> [shape: f32[1,1], index: 8, kind: input, shape index: {}]
  %s9 = inlined_call_operand.vmem [shape: f32[128,1], index: 9, kind: output, shape index: {}]
  %s10 = sld [smem:[#allocation0]]
  $region46: #{tpu_custom_call.1} parent=0
    _
  %s12 = ssub.s32 1, %s10
  %s13 = scalar_select 0, %s12, %s10
  %v14 = vstv %s8
  %15 = vst [vmem:[#allocation2] sm:$0x1] %v14
  // Predicated region
  $region2: #{tpu_custom_call.1} parent=0 // pred_check
    _
  $region3: #{tpu_custom_call.1} parent=0 // pred_check_branch
    %17 = sbr.rel (0) target = $region5
  $region4: #{tpu_custom_call.1} parent=0 // pred_region
    _
  $region5: #{tpu_custom_call.1} parent=0 // pred_fallthru
    _
  // Predicated region
  $region6: #{tpu_custom_call.1} parent=0 // pred_check
    _
  $region7: #{tpu_custom_call.1} parent=0 // pred_check_branch
    %19 = sbr.rel (0) target = $region9
  $region8: #{tpu_custom_call.1} parent=0 // pred_region
    _
  $region9: #{tpu_custom_call.1} parent=0 // pred_fallthru
    _
  // Predicated region
  $region10: #{tpu_custom_call.1} parent=0 // pred_check
    _
  $region11: #{tpu_custom_call.1} parent=0 // pred_check_branch
    %21 = sbr.rel (0) target = $region13
  $region12: #{tpu_custom_call.1} parent=0 // pred_region
    _
  $region13: #{tpu_custom_call.1} parent=0 // pred_fallthru
    _
  // Predicated region
  $region14: #{tpu_custom_call.1} parent=0 // pred_check
    _
  $region15: #{tpu_custom_call.1} parent=0 // pred_check_branch
    %23 = sbr.rel (0) target = $region17
  $region16: #{tpu_custom_call.1} parent=0 // pred_region
    _
  $region17: #{tpu_custom_call.1} parent=0 // pred_fallthru
    _
  // Predicated region
  $region18: #{tpu_custom_call.1} parent=0 // pred_check
    _
  $region19: #{tpu_custom_call.1} parent=0 // pred_check_branch
    %25 = sbr.rel (0) target = $region21
  $region20: #{tpu_custom_call.1} parent=0 // pred_region
    _
  $region21: #{tpu_custom_call.1} parent=0 // pred_fallthru
    _
  // Predicated region
  $region22: #{tpu_custom_call.1} parent=0 // pred_check
    _
  $region23: #{tpu_custom_call.1} parent=0 // pred_check_branch
    %27 = sbr.rel (0) target = $region25
  $region24: #{tpu_custom_call.1} parent=0 // pred_region
    _
  $region25: #{tpu_custom_call.1} parent=0 // pred_fallthru
    _
  // Predicated region
  $region26: #{tpu_custom_call.1} parent=0 // pred_check
    _
  $region27: #{tpu_custom_call.1} parent=0 // pred_check_branch
    %29 = sbr.rel (0) target = $region29
  $region28: #{tpu_custom_call.1} parent=0 // pred_region
    _
  $region29: #{tpu_custom_call.1} parent=0 // pred_fallthru
    _
  // Predicated region
  $region30: #{tpu_custom_call.1} parent=0 // pred_check
    _
  $region31: #{tpu_custom_call.1} parent=0 // pred_check_branch
    %31 = sbr.rel (0) target = $region33
  $region32: #{tpu_custom_call.1} parent=0 // pred_region
    _
  $region33: #{tpu_custom_call.1} parent=0 // pred_fallthru
    _
  // Predicated region
  $region34: #{tpu_custom_call.1} parent=0 // pred_check
    _
  $region35: #{tpu_custom_call.1} parent=0 // pred_check_branch
    %33 = sbr.rel (0) target = $region37
  $region36: #{tpu_custom_call.1} parent=0 // pred_region
    _
  $region37: #{tpu_custom_call.1} parent=0 // pred_fallthru
    _
  %v35 = vld [vmem:[%s0] sm:$0xf]
  %v36 = vld [vmem:[%s0 + $0x4] sm:$0xf]
  %v37 = vld [vmem:[%s0 + $0x8] sm:$0xf]
  %v38 = vld [vmem:[%s0 + $0xc] sm:$0xf]
  %v39 = vld [vmem:[%s0 + $0x10] sm:$0xf]
  %v40 = vld [vmem:[%s0 + $0x14] sm:$0xf]
  %v41 = vld [vmem:[%s0 + $0x18] sm:$0xf]
  %v42 = vld [vmem:[%s0 + $0x1c] sm:$0xf]
  %v43 = vld [vmem:[%s0 + $0x20] sm:$0xf]
  %v44 = vld [vmem:[%s0 + $0x24] sm:$0xf]
  %v45 = vld [vmem:[%s0 + $0x28] sm:$0xf]
  %v46 = vld [vmem:[%s0 + $0x2c] sm:$0xf]
  %v47 = vld [vmem:[%s0 + $0x30] sm:$0xf]
  %v48 = vld [vmem:[%s0 + $0x34] sm:$0xf]
  %v49 = vld [vmem:[%s0 + $0x38] sm:$0xf]
  %v50 = vld [vmem:[%s0 + $0x3c] sm:$0xf]
  %v51 = vld [vmem:[%s2] sm:$0xf]
  %v52 = vld [vmem:[%s2 + $0x4] sm:$0x1]
  %v53 = vld [vmem:[%s1] sm:$0xf]
  %v54 = vld [vmem:[%s1 + $0x4] sm:$0xf]
  %v55 = vld [vmem:[%s1 + $0x8] sm:$0xf]
  %v56 = vld [vmem:[%s1 + $0xc] sm:$0xf]
  %v57 = vld [vmem:[%s1 + $0x10] sm:$0xf]
  %v58 = vld [vmem:[%s1 + $0x14] sm:$0xf]
  %v59 = vld [vmem:[%s1 + $0x18] sm:$0xf]
  %v60 = vld [vmem:[%s1 + $0x1c] sm:$0xf]
  %v61 = vld [vmem:[%s1 + $0x20] sm:$0xf]
  %v62 = vld [vmem:[%s1 + $0x24] sm:$0xf]
  %v63 = vld [vmem:[%s1 + $0x28] sm:$0xf]
  %v64 = vld [vmem:[%s1 + $0x2c] sm:$0xf]
  %v65 = vld [vmem:[%s1 + $0x30] sm:$0xf]
  %v66 = vld [vmem:[%s1 + $0x34] sm:$0xf]
  %v67 = vld [vmem:[%s1 + $0x38] sm:$0xf]
  %v68 = vld [vmem:[%s1 + $0x3c] sm:$0xf]
  %v69 = vld [vmem:[%s3] sm:$0x7]
  %v86 = vunpack.c.l.b16 %v53
  %v87 = vunpack.c.l.b16 %v54
  %v88 = vunpack.c.l.b16 %v55
  %v89 = vunpack.c.l.b16 %v56
  %v90 = vunpack.c.l.b16 %v57
  %v91 = vunpack.c.l.b16 %v58
  %v92 = vunpack.c.l.b16 %v59
  %v93 = vunpack.c.l.b16 %v60
  %v94 = vunpack.c.l.b16 %v61
  %v95 = vunpack.c.l.b16 %v62
  %v96 = vunpack.c.l.b16 %v63
  %v97 = vunpack.c.l.b16 %v64
  %v98 = vunpack.c.l.b16 %v65
  %v99 = vunpack.c.l.b16 %v66
  %v100 = vunpack.c.l.b16 %v67
  %v101 = vunpack.c.l.b16 %v68
  %v102 = vpack.c.b16 %v87, %v86
  %v103 = vpack.c.b16 %v89, %v88
  %v104 = vpack.c.b16 %v91, %v90
  %v105 = vpack.c.b16 %v93, %v92
  %v106 = vpack.c.b16 %v95, %v94
  %v107 = vpack.c.b16 %v97, %v96
  %v108 = vpack.c.b16 %v99, %v98
  %v109 = vpack.c.b16 %v101, %v100
  %vm110 = vcmask 48128
  %v112 = vsel %vm110, %v102, 0
  %v115 = vsel %vm110, %v103, 0
  %v118 = vsel %vm110, %v104, 0
  %v121 = vsel %vm110, %v105, 0
  %v124 = vsel %vm110, %v106, 0
  %v127 = vsel %vm110, %v107, 0
  %v130 = vsel %vm110, %v108, 0
  %v133 = vsel %vm110, %v109, 0
  %vm135 = vcmask 1042432
  %v137 = vsel %vm135, %v69, 0
  %139 = vmatprep.subr.bf16.mxu0 0
  %140 = vmatpush1.bf16.msra.mxu0 %v137
  %141 = vmatprep.subr.bf16.mxu0 0
  %142 = vmatpush1.bf16.msra.mxu0 0
  %143 = vmatprep.subr.bf16.mxu0 0
  %144 = vmatpush1.bf16.msra.mxu0 0
  %145 = vmatprep.subr.bf16.mxu0 0
  %146 = vmatpush1.bf16.msra.mxu0 0
  %147 = vmatprep.subr.bf16.mxu0 0
  %148 = vmatpush1.bf16.msra.mxu0 0
  %149 = vmatprep.subr.bf16.mxu0 0
  %150 = vmatpush1.bf16.msra.mxu0 0
  %151 = vmatprep.subr.bf16.mxu0 0
  %152 = vmatpush1.bf16.msra.mxu0 0
  %153 = vmatprep.subr.bf16.mxu0 0
  %154 = vmatpush1.bf16.msra.mxu0 0
  %155 = vmatprep.subr.bf16.mxu0 0
  %156 = vmatpush1.bf16.msra.mxu0 0
  %157 = vmatprep.subr.bf16.mxu0 0
  %158 = vmatpush1.bf16.msra.mxu0 0
  %159 = vmatprep.subr.bf16.mxu0 0
  %160 = vmatpush1.bf16.msra.mxu0 0
  %161 = vmatprep.subr.bf16.mxu0 0
  %162 = vmatpush1.bf16.msra.mxu0 0
  %163 = vmatprep.subr.bf16.mxu0 0
  %164 = vmatpush1.bf16.msra.mxu0 0
  %165 = vmatprep.subr.bf16.mxu0 0
  %166 = vmatpush1.bf16.msra.mxu0 0
  %167 = vmatprep.subr.bf16.mxu0 0
  %168 = vmatpush1.bf16.msra.mxu0 0
  %169 = vmatprep.subr.bf16.mxu0 0
  %170 = vmatpush1.bf16.msra.mxu0 0
  %171 = vmatprep.mubr.bf16.mxu0 0
  %172 = vmatmul.mubr.bf16.gmra.mrb[0].mxu0 %v112
  %v173 = vpop.f32.mrb[0].mxu0
  %v174 = vadd.f32 0.0, %v173
  %v175 = vpop.f32.mrb[0].mxu0
  %v176 = vpop.f32.mrb[0].mxu0
  %v177 = vadd.f32 0.0, %v176
  %v178 = vpop.f32.mrb[0].mxu0
  %179 = vmatprep.mubr.bf16.mxu0 0
  %180 = vmatmul.mubr.bf16.gmra.mrb[0].mxu0 %v115
  %v181 = vpop.f32.mrb[0].mxu0
  %v182 = vadd.f32 0.0, %v181
  %v183 = vpop.f32.mrb[0].mxu0
  %v184 = vpop.f32.mrb[0].mxu0
  %v185 = vadd.f32 0.0, %v184
  %v186 = vpop.f32.mrb[0].mxu0
  %187 = vmatprep.mubr.bf16.mxu0 0
  %188 = vmatmul.mubr.bf16.gmra.mrb[0].mxu0 %v118
  %v189 = vpop.f32.mrb[0].mxu0
  %v190 = vadd.f32 0.0, %v189
  %v191 = vpop.f32.mrb[0].mxu0
  %v192 = vpop.f32.mrb[0].mxu0
  %v193 = vadd.f32 0.0, %v192
  %v194 = vpop.f32.mrb[0].mxu0
  %195 = vmatprep.mubr.bf16.mxu0 0
  %196 = vmatmul.mubr.bf16.gmra.mrb[0].mxu0 %v121
  %v197 = vpop.f32.mrb[0].mxu0
  %v198 = vadd.f32 0.0, %v197
  %v199 = vpop.f32.mrb[0].mxu0
  %v200 = vpop.f32.mrb[0].mxu0
  %v201 = vadd.f32 0.0, %v200
  %v202 = vpop.f32.mrb[0].mxu0
  %203 = vmatprep.mubr.bf16.mxu0 0
  %204 = vmatmul.mubr.bf16.gmra.mrb[0].mxu0 %v124
  %v205 = vpop.f32.mrb[0].mxu0
  %v206 = vadd.f32 0.0, %v205
  %v207 = vpop.f32.mrb[0].mxu0
  %v208 = vpop.f32.mrb[0].mxu0
  %v209 = vadd.f32 0.0, %v208
  %v210 = vpop.f32.mrb[0].mxu0
  %211 = vmatprep.mubr.bf16.mxu0 0
  %212 = vmatmul.mubr.bf16.gmra.mrb[0].mxu0 %v127
  %v213 = vpop.f32.mrb[0].mxu0
  %v214 = vadd.f32 0.0, %v213
  %v215 = vpop.f32.mrb[0].mxu0
  %v216 = vpop.f32.mrb[0].mxu0
  %v217 = vadd.f32 0.0, %v216
  %v218 = vpop.f32.mrb[0].mxu0
  %219 = vmatprep.mubr.bf16.mxu0 0
  %220 = vmatmul.mubr.bf16.gmra.mrb[0].mxu0 %v130
  %v221 = vpop.f32.mrb[0].mxu0
  %v222 = vadd.f32 0.0, %v221
  %v223 = vpop.f32.mrb[0].mxu0
  %v224 = vpop.f32.mrb[0].mxu0
  %v225 = vadd.f32 0.0, %v224
  %v226 = vpop.f32.mrb[0].mxu0
  %227 = vmatprep.mubr.bf16.mxu0 0
  %228 = vmatmul.mubr.bf16.gmra.mrb[0].mxu0 %v133
  %v229 = vpop.f32.mrb[0].mxu0
  %v230 = vadd.f32 0.0, %v229
  %v231 = vpop.f32.mrb[0].mxu0
  %v232 = vpop.f32.mrb[0].mxu0
  %v233 = vadd.f32 0.0, %v232
  %v234 = vpop.f32.mrb[0].mxu0
  %235 = vdwg.mxu0
  %v252 = vunpack.c.l.b16 %v35
  %v253 = vunpack.c.l.b16 %v36
  %v254 = vunpack.c.l.b16 %v37
  %v255 = vunpack.c.l.b16 %v38
  %v256 = vunpack.c.l.b16 %v39
  %v257 = vunpack.c.l.b16 %v40
  %v258 = vunpack.c.l.b16 %v41
  %v259 = vunpack.c.l.b16 %v42
  %v260 = vunpack.c.l.b16 %v43
  %v261 = vunpack.c.l.b16 %v44
  %v262 = vunpack.c.l.b16 %v45
  %v263 = vunpack.c.l.b16 %v46
  %v264 = vunpack.c.l.b16 %v47
  %v265 = vunpack.c.l.b16 %v48
  %v266 = vunpack.c.l.b16 %v49
  %v267 = vunpack.c.l.b16 %v50
  %v268 = vpack.c.b16 %v253, %v252
  %v269 = vpack.c.b16 %v255, %v254
  %v270 = vpack.c.b16 %v257, %v256
  %v271 = vpack.c.b16 %v259, %v258
  %v272 = vpack.c.b16 %v261, %v260
  %v273 = vpack.c.b16 %v263, %v262
  %v274 = vpack.c.b16 %v265, %v264
  %v275 = vpack.c.b16 %v267, %v266
  %v278 = vunpack.c.l.b16 %v51
  %v279 = vunpack.c.l.b16 %v52
  %v280 = vpack.c.b16 %v279, %v278
  %vm281 = vcmask 80896
  %v283 = vsel %vm281, %v268, 0
  %v286 = vsel %vm281, %v269, 0
  %v289 = vsel %vm281, %v270, 0
  %v292 = vsel %vm281, %v271, 0
  %v295 = vsel %vm281, %v272, 0
  %v298 = vsel %vm281, %v273, 0
  %v301 = vsel %vm281, %v274, 0
  %v304 = vsel %vm281, %v275, 0
  %vm306 = vcmask 1044480
  %v308 = vsel %vm306, %v280, 0
  %310 = vmatprep.subr.bf16.mxu0 0
  %311 = vmatpush1.bf16.msra.mxu0 %v308
  %312 = vmatprep.subr.bf16.mxu0 0
  %313 = vmatpush1.bf16.msra.mxu0 0
  %314 = vmatprep.subr.bf16.mxu0 0
  %315 = vmatpush1.bf16.msra.mxu0 0
  %316 = vmatprep.subr.bf16.mxu0 0
  %317 = vmatpush1.bf16.msra.mxu0 0
  %318 = vmatprep.subr.bf16.mxu0 0
  %319 = vmatpush1.bf16.msra.mxu0 0
  %320 = vmatprep.subr.bf16.mxu0 0
  %321 = vmatpush1.bf16.msra.mxu0 0
  %322 = vmatprep.subr.bf16.mxu0 0
  %323 = vmatpush1.bf16.msra.mxu0 0
  %324 = vmatprep.subr.bf16.mxu0 0
  %325 = vmatpush1.bf16.msra.mxu0 0
  %326 = vmatprep.subr.bf16.mxu0 0
  %327 = vmatpush1.bf16.msra.mxu0 0
  %328 = vmatprep.subr.bf16.mxu0 0
  %329 = vmatpush1.bf16.msra.mxu0 0
  %330 = vmatprep.subr.bf16.mxu0 0
  %331 = vmatpush1.bf16.msra.mxu0 0
  %332 = vmatprep.subr.bf16.mxu0 0
  %333 = vmatpush1.bf16.msra.mxu0 0
  %334 = vmatprep.subr.bf16.mxu0 0
  %335 = vmatpush1.bf16.msra.mxu0 0
  %336 = vmatprep.subr.bf16.mxu0 0
  %337 = vmatpush1.bf16.msra.mxu0 0
  %338 = vmatprep.subr.bf16.mxu0 0
  %339 = vmatpush1.bf16.msra.mxu0 0
  %340 = vmatprep.subr.bf16.mxu0 0
  %341 = vmatpush1.bf16.msra.mxu0 0
  %342 = vmatprep.mubr.bf16.mxu0 0
  %343 = vmatmul.mubr.bf16.gmra.mrb[0].mxu0 %v283
  %v344 = vpop.f32.mrb[0].mxu0
  %v345 = vadd.f32 %v174, %v344
  %v346 = vpop.f32.mrb[0].mxu0
  %v347 = vpop.f32.mrb[0].mxu0
  %v348 = vadd.f32 %v177, %v347
  %v349 = vpop.f32.mrb[0].mxu0
  %350 = vmatprep.mubr.bf16.mxu0 0
  %351 = vmatmul.mubr.bf16.gmra.mrb[0].mxu0 %v286
  %v352 = vpop.f32.mrb[0].mxu0
  %v353 = vadd.f32 %v182, %v352
  %v354 = vpop.f32.mrb[0].mxu0
  %v355 = vpop.f32.mrb[0].mxu0
  %v356 = vadd.f32 %v185, %v355
  %v357 = vpop.f32.mrb[0].mxu0
  %358 = vmatprep.mubr.bf16.mxu0 0
  %359 = vmatmul.mubr.bf16.gmra.mrb[0].mxu0 %v289
  %v360 = vpop.f32.mrb[0].mxu0
  %v361 = vadd.f32 %v190, %v360
  %v362 = vpop.f32.mrb[0].mxu0
  %v363 = vpop.f32.mrb[0].mxu0
  %v364 = vadd.f32 %v193, %v363
  %v365 = vpop.f32.mrb[0].mxu0
  %366 = vmatprep.mubr.bf16.mxu0 0
  %367 = vmatmul.mubr.bf16.gmra.mrb[0].mxu0 %v292
  %v368 = vpop.f32.mrb[0].mxu0
  %v369 = vadd.f32 %v198, %v368
  %v370 = vpop.f32.mrb[0].mxu0
  %v371 = vpop.f32.mrb[0].mxu0
  %v372 = vadd.f32 %v201, %v371
  %v373 = vpop.f32.mrb[0].mxu0
  %374 = vmatprep.mubr.bf16.mxu0 0
  %375 = vmatmul.mubr.bf16.gmra.mrb[0].mxu0 %v295
  %v376 = vpop.f32.mrb[0].mxu0
  %v377 = vadd.f32 %v206, %v376
  %v378 = vpop.f32.mrb[0].mxu0
  %v379 = vpop.f32.mrb[0].mxu0
  %v380 = vadd.f32 %v209, %v379
  %v381 = vpop.f32.mrb[0].mxu0
  %382 = vmatprep.mubr.bf16.mxu0 0
  %383 = vmatmul.mubr.bf16.gmra.mrb[0].mxu0 %v298
  %v384 = vpop.f32.mrb[0].mxu0
  %v385 = vadd.f32 %v214, %v384
  %v386 = vpop.f32.mrb[0].mxu0
  %v387 = vpop.f32.mrb[0].mxu0
  %v388 = vadd.f32 %v217, %v387
  %v389 = vpop.f32.mrb[0].mxu0
  %390 = vmatprep.mubr.bf16.mxu0 0
  %391 = vmatmul.mubr.bf16.gmra.mrb[0].mxu0 %v301
  %v392 = vpop.f32.mrb[0].mxu0
  %v393 = vadd.f32 %v222, %v392
  %v394 = vpop.f32.mrb[0].mxu0
  %v395 = vpop.f32.mrb[0].mxu0
  %v396 = vadd.f32 %v225, %v395
  %v397 = vpop.f32.mrb[0].mxu0
  %398 = vmatprep.mubr.bf16.mxu0 0
  %399 = vmatmul.mubr.bf16.gmra.mrb[0].mxu0 %v304
  %v400 = vpop.f32.mrb[0].mxu0
  %v401 = vadd.f32 %v230, %v400
  %v402 = vpop.f32.mrb[0].mxu0
  %v403 = vpop.f32.mrb[0].mxu0
  %v404 = vadd.f32 %v233, %v403
  %v405 = vpop.f32.mrb[0].mxu0
  %406 = vdwg.mxu0
  %v407 = vld [vmem:[%s4] sm:$0x1]
  %v409 = vlaneseq
  %v410 = vshrl.u32 %v409, 7
  %v411 = vsub.s32 0, %v410
  %v412 = vrot.slane %v407, %v411
  %v414 = vadd.f32 %v345, %v412
  %v415 = vadd.f32 %v348, %v412
  %v416 = vadd.f32 %v353, %v412
  %v417 = vadd.f32 %v356, %v412
  %v418 = vadd.f32 %v361, %v412
  %v419 = vadd.f32 %v364, %v412
  %v420 = vadd.f32 %v369, %v412
  %v421 = vadd.f32 %v372, %v412
  %v422 = vadd.f32 %v377, %v412
  %v423 = vadd.f32 %v380, %v412
  %v424 = vadd.f32 %v385, %v412
  %v425 = vadd.f32 %v388, %v412
  %v426 = vadd.f32 %v393, %v412
  %v427 = vadd.f32 %v396, %v412
  %v428 = vadd.f32 %v401, %v412
  %v429 = vadd.f32 %v404, %v412
  %v430 = vmax.f32 %v414, 0.0
  %v431 = vmax.f32 %v415, 0.0
  %v432 = vmax.f32 %v416, 0.0
  %v433 = vmax.f32 %v417, 0.0
  %v434 = vmax.f32 %v418, 0.0
  %v435 = vmax.f32 %v419, 0.0
  %v436 = vmax.f32 %v420, 0.0
  %v437 = vmax.f32 %v421, 0.0
  %v438 = vmax.f32 %v422, 0.0
  %v439 = vmax.f32 %v423, 0.0
  %v440 = vmax.f32 %v424, 0.0
  %v441 = vmax.f32 %v425, 0.0
  %v442 = vmax.f32 %v426, 0.0
  %v443 = vmax.f32 %v427, 0.0
  %v444 = vmax.f32 %v428, 0.0
  %v445 = vmax.f32 %v429, 0.0
  %v446 = vpack.c.bf16 %v431, %v430
  %v447 = vpack.c.bf16 %v433, %v432
  %v448 = vpack.c.bf16 %v435, %v434
  %v449 = vpack.c.bf16 %v437, %v436
  %v450 = vpack.c.bf16 %v439, %v438
  %v451 = vpack.c.bf16 %v441, %v440
  %v452 = vpack.c.bf16 %v443, %v442
  %v453 = vpack.c.bf16 %v445, %v444
  %v454 = vld [vmem:[%s5] sm:$0xf]
  %v455 = vld [vmem:[%s5 + $0x4] sm:$0xf]
  %v456 = vld [vmem:[%s5 + $0x8] sm:$0xf]
  %v457 = vld [vmem:[%s5 + $0xc] sm:$0xf]
  %v458 = vld [vmem:[%s6] sm:$0x1]
  %v460 = vlaneseq
  %v461 = vshrl.u32 %v460, 7
  %v462 = vsub.s32 0, %v461
  %v463 = vrot.slane %v458, %v462
  %v469 = vunpack.c.l.b16 %v454
  %v470 = vunpack.c.l.b16 %v455
  %v471 = vunpack.c.l.b16 %v456
  %v472 = vunpack.c.l.b16 %v457
  %v473 = vpack.c.b16 %v470, %v469
  %v474 = vpack.c.b16 %v472, %v471
  %vm477 = vcmask 261120
  %v479 = vsel %vm477, %v446, 0
  %v482 = vsel %vm477, %v447, 0
  %v485 = vsel %vm477, %v448, 0
  %v488 = vsel %vm477, %v449, 0
  %v491 = vsel %vm477, %v450, 0
  %v494 = vsel %vm477, %v451, 0
  %v497 = vsel %vm477, %v452, 0
  %v500 = vsel %vm477, %v453, 0
  %502 = vmatprep.subr.bf16.mxu0 0
  %503 = vmatpush1.bf16.msra.mxu0 %v473
  %504 = vmatprep.subr.bf16.mxu0 0
  %505 = vmatpush1.bf16.msra.mxu0 %v474
  %506 = vmatprep.subr.bf16.mxu0 0
  %507 = vmatpush1.bf16.msra.mxu0 0
  %508 = vmatprep.subr.bf16.mxu0 0
  %509 = vmatpush1.bf16.msra.mxu0 0
  %510 = vmatprep.subr.bf16.mxu0 0
  %511 = vmatpush1.bf16.msra.mxu0 0
  %512 = vmatprep.subr.bf16.mxu0 0
  %513 = vmatpush1.bf16.msra.mxu0 0
  %514 = vmatprep.subr.bf16.mxu0 0
  %515 = vmatpush1.bf16.msra.mxu0 0
  %516 = vmatprep.subr.bf16.mxu0 0
  %517 = vmatpush1.bf16.msra.mxu0 0
  %518 = vmatprep.subr.bf16.mxu0 0
  %519 = vmatpush1.bf16.msra.mxu0 0
  %520 = vmatprep.subr.bf16.mxu0 0
  %521 = vmatpush1.bf16.msra.mxu0 0
  %522 = vmatprep.subr.bf16.mxu0 0
  %523 = vmatpush1.bf16.msra.mxu0 0
  %524 = vmatprep.subr.bf16.mxu0 0
  %525 = vmatpush1.bf16.msra.mxu0 0
  %526 = vmatprep.subr.bf16.mxu0 0
  %527 = vmatpush1.bf16.msra.mxu0 0
  %528 = vmatprep.subr.bf16.mxu0 0
  %529 = vmatpush1.bf16.msra.mxu0 0
  %530 = vmatprep.subr.bf16.mxu0 0
  %531 = vmatpush1.bf16.msra.mxu0 0
  %532 = vmatprep.subr.bf16.mxu0 0
  %533 = vmatpush1.bf16.msra.mxu0 0
  %534 = vmatprep.mubr.bf16.mxu0 0
  %535 = vmatmul.mubr.bf16.gmra.mrb[0].mxu0 %v479
  %v536 = vpop.f32.mrb[0].mxu0
  %v537 = vadd.f32 %v463, %v536
  %v538 = vpop.f32.mrb[0].mxu0
  %v539 = vpop.f32.mrb[0].mxu0
  %v540 = vadd.f32 %v463, %v539
  %v541 = vpop.f32.mrb[0].mxu0
  %542 = vmatprep.mubr.bf16.mxu0 0
  %543 = vmatmul.mubr.bf16.gmra.mrb[0].mxu0 %v482
  %v544 = vpop.f32.mrb[0].mxu0
  %v545 = vadd.f32 %v463, %v544
  %v546 = vpop.f32.mrb[0].mxu0
  %v547 = vpop.f32.mrb[0].mxu0
  %v548 = vadd.f32 %v463, %v547
  %v549 = vpop.f32.mrb[0].mxu0
  %550 = vmatprep.mubr.bf16.mxu0 0
  %551 = vmatmul.mubr.bf16.gmra.mrb[0].mxu0 %v485
  %v552 = vpop.f32.mrb[0].mxu0
  %v553 = vadd.f32 %v463, %v552
  %v554 = vpop.f32.mrb[0].mxu0
  %v555 = vpop.f32.mrb[0].mxu0
  %v556 = vadd.f32 %v463, %v555
  %v557 = vpop.f32.mrb[0].mxu0
  %558 = vmatprep.mubr.bf16.mxu0 0
  %559 = vmatmul.mubr.bf16.gmra.mrb[0].mxu0 %v488
  %v560 = vpop.f32.mrb[0].mxu0
  %v561 = vadd.f32 %v463, %v560
  %v562 = vpop.f32.mrb[0].mxu0
  %v563 = vpop.f32.mrb[0].mxu0
  %v564 = vadd.f32 %v463, %v563
  %v565 = vpop.f32.mrb[0].mxu0
  %566 = vmatprep.mubr.bf16.mxu0 0
  %567 = vmatmul.mubr.bf16.gmra.mrb[0].mxu0 %v491
  %v568 = vpop.f32.mrb[0].mxu0
  %v569 = vadd.f32 %v463, %v568
  %v570 = vpop.f32.mrb[0].mxu0
  %v571 = vpop.f32.mrb[0].mxu0
  %v572 = vadd.f32 %v463, %v571
  %v573 = vpop.f32.mrb[0].mxu0
  %574 = vmatprep.mubr.bf16.mxu0 0
  %575 = vmatmul.mubr.bf16.gmra.mrb[0].mxu0 %v494
  %v576 = vpop.f32.mrb[0].mxu0
  %v577 = vadd.f32 %v463, %v576
  %v578 = vpop.f32.mrb[0].mxu0
  %v579 = vpop.f32.mrb[0].mxu0
  %v580 = vadd.f32 %v463, %v579
  %v581 = vpop.f32.mrb[0].mxu0
  %582 = vmatprep.mubr.bf16.mxu0 0
  %583 = vmatmul.mubr.bf16.gmra.mrb[0].mxu0 %v497
  %v584 = vpop.f32.mrb[0].mxu0
  %v585 = vadd.f32 %v463, %v584
  %v586 = vpop.f32.mrb[0].mxu0
  %v587 = vpop.f32.mrb[0].mxu0
  %v588 = vadd.f32 %v463, %v587
  %v589 = vpop.f32.mrb[0].mxu0
  %590 = vmatprep.mubr.bf16.mxu0 0
  %591 = vmatmul.mubr.bf16.gmra.mrb[0].mxu0 %v500
  %v592 = vpop.f32.mrb[0].mxu0
  %v593 = vadd.f32 %v463, %v592
  %v594 = vpop.f32.mrb[0].mxu0
  %v595 = vpop.f32.mrb[0].mxu0
  %v596 = vadd.f32 %v463, %v595
  %v597 = vpop.f32.mrb[0].mxu0
  %598 = vdwg.mxu0
  %v599 = vmax.f32 %v537, 0.0
  %v600 = vmax.f32 %v540, 0.0
  %v601 = vmax.f32 %v545, 0.0
  %v602 = vmax.f32 %v548, 0.0
  %v603 = vmax.f32 %v553, 0.0
  %v604 = vmax.f32 %v556, 0.0
  %v605 = vmax.f32 %v561, 0.0
  %v606 = vmax.f32 %v564, 0.0
  %v607 = vmax.f32 %v569, 0.0
  %v608 = vmax.f32 %v572, 0.0
  %v609 = vmax.f32 %v577, 0.0
  %v610 = vmax.f32 %v580, 0.0
  %v611 = vmax.f32 %v585, 0.0
  %v612 = vmax.f32 %v588, 0.0
  %v613 = vmax.f32 %v593, 0.0
  %v614 = vmax.f32 %v596, 0.0
  %v615 = vpack.c.bf16 %v600, %v599
  %v616 = vpack.c.bf16 %v602, %v601
  %v617 = vpack.c.bf16 %v604, %v603
  %v618 = vpack.c.bf16 %v606, %v605
  %v619 = vpack.c.bf16 %v608, %v607
  %v620 = vpack.c.bf16 %v610, %v609
  %v621 = vpack.c.bf16 %v612, %v611
  %v622 = vpack.c.bf16 %v614, %v613
  %v623 = vld [vmem:[%s7] sm:$0xf]
  %v624 = vld [vmem:[%s7 + $0x4] sm:$0xf]
  %v625 = vld [vmem:[%s7 + $0x8] sm:$0xf]
  %v626 = vld [vmem:[%s7 + $0xc] sm:$0xf]
  %v627 = vld [vmem:[#allocation2] sm:$0x1]
  %v629 = vlaneseq
  %v630 = vshrl.u32 %v629, 7
  %v631 = vsub.s32 0, %v630
  %v632 = vrot.slane %v627, %v631
  %v638 = vunpack.c.l.b16 %v623
  %v639 = vunpack.c.l.b16 %v624
  %v640 = vunpack.c.l.b16 %v625
  %v641 = vunpack.c.l.b16 %v626
  %v642 = vpack.c.b16 %v639, %v638
  %v643 = vpack.c.b16 %v641, %v640
  %v647 = vsel %vm477, %v615, 0
  %v650 = vsel %vm477, %v616, 0
  %v653 = vsel %vm477, %v617, 0
  %v656 = vsel %vm477, %v618, 0
  %v659 = vsel %vm477, %v619, 0
  %v662 = vsel %vm477, %v620, 0
  %v665 = vsel %vm477, %v621, 0
  %v668 = vsel %vm477, %v622, 0
  %670 = vmatprep.subr.bf16.mxu0 0
  %671 = vmatpush1.bf16.msra.mxu0 %v642
  %672 = vmatprep.subr.bf16.mxu0 0
  %673 = vmatpush1.bf16.msra.mxu0 %v643
  %674 = vmatprep.subr.bf16.mxu0 0
  %675 = vmatpush1.bf16.msra.mxu0 0
  %676 = vmatprep.subr.bf16.mxu0 0
  %677 = vmatpush1.bf16.msra.mxu0 0
  %678 = vmatprep.subr.bf16.mxu0 0
  %679 = vmatpush1.bf16.msra.mxu0 0
  %680 = vmatprep.subr.bf16.mxu0 0
  %681 = vmatpush1.bf16.msra.mxu0 0
  %682 = vmatprep.subr.bf16.mxu0 0
  %683 = vmatpush1.bf16.msra.mxu0 0
  %684 = vmatprep.subr.bf16.mxu0 0
  %685 = vmatpush1.bf16.msra.mxu0 0
  %686 = vmatprep.subr.bf16.mxu0 0
  %687 = vmatpush1.bf16.msra.mxu0 0
  %688 = vmatprep.subr.bf16.mxu0 0
  %689 = vmatpush1.bf16.msra.mxu0 0
  %690 = vmatprep.subr.bf16.mxu0 0
  %691 = vmatpush1.bf16.msra.mxu0 0
  %692 = vmatprep.subr.bf16.mxu0 0
  %693 = vmatpush1.bf16.msra.mxu0 0
  %694 = vmatprep.subr.bf16.mxu0 0
  %695 = vmatpush1.bf16.msra.mxu0 0
  %696 = vmatprep.subr.bf16.mxu0 0
  %697 = vmatpush1.bf16.msra.mxu0 0
  %698 = vmatprep.subr.bf16.mxu0 0
  %699 = vmatpush1.bf16.msra.mxu0 0
  %700 = vmatprep.subr.bf16.mxu0 0
  %701 = vmatpush1.bf16.msra.mxu0 0
  %702 = vmatprep.mubr.bf16.mxu0 0
  %703 = vmatmul.mubr.bf16.gmra.mrb[0].mxu0 %v647
  %v704 = vpop.f32.mrb[0].mxu0
  %v705 = vadd.f32 %v632, %v704
  %v706 = vpop.f32.mrb[0].mxu0
  %v707 = vpop.f32.mrb[0].mxu0
  %v708 = vadd.f32 %v632, %v707
  %v709 = vpop.f32.mrb[0].mxu0
  %710 = vmatprep.mubr.bf16.mxu0 0
  %711 = vmatmul.mubr.bf16.gmra.mrb[0].mxu0 %v650
  %v712 = vpop.f32.mrb[0].mxu0
  %v713 = vadd.f32 %v632, %v712
  %v714 = vpop.f32.mrb[0].mxu0
  %v715 = vpop.f32.mrb[0].mxu0
  %v716 = vadd.f32 %v632, %v715
  %v717 = vpop.f32.mrb[0].mxu0
  %718 = vmatprep.mubr.bf16.mxu0 0
  %719 = vmatmul.mubr.bf16.gmra.mrb[0].mxu0 %v653
  %v720 = vpop.f32.mrb[0].mxu0
  %v721 = vadd.f32 %v632, %v720
  %v722 = vpop.f32.mrb[0].mxu0
  %v723 = vpop.f32.mrb[0].mxu0
  %v724 = vadd.f32 %v632, %v723
  %v725 = vpop.f32.mrb[0].mxu0
  %726 = vmatprep.mubr.bf16.mxu0 0
  %727 = vmatmul.mubr.bf16.gmra.mrb[0].mxu0 %v656
  %v728 = vpop.f32.mrb[0].mxu0
  %v729 = vadd.f32 %v632, %v728
  %v730 = vpop.f32.mrb[0].mxu0
  %v731 = vpop.f32.mrb[0].mxu0
  %v732 = vadd.f32 %v632, %v731
  %v733 = vpop.f32.mrb[0].mxu0
  %734 = vmatprep.mubr.bf16.mxu0 0
  %735 = vmatmul.mubr.bf16.gmra.mrb[0].mxu0 %v659
  %v736 = vpop.f32.mrb[0].mxu0
  %v737 = vadd.f32 %v632, %v736
  %v738 = vpop.f32.mrb[0].mxu0
  %v739 = vpop.f32.mrb[0].mxu0
  %v740 = vadd.f32 %v632, %v739
  %v741 = vpop.f32.mrb[0].mxu0
  %742 = vmatprep.mubr.bf16.mxu0 0
  %743 = vmatmul.mubr.bf16.gmra.mrb[0].mxu0 %v662
  %v744 = vpop.f32.mrb[0].mxu0
  %v745 = vadd.f32 %v632, %v744
  %v746 = vpop.f32.mrb[0].mxu0
  %v747 = vpop.f32.mrb[0].mxu0
  %v748 = vadd.f32 %v632, %v747
  %v749 = vpop.f32.mrb[0].mxu0
  %750 = vmatprep.mubr.bf16.mxu0 0
  %751 = vmatmul.mubr.bf16.gmra.mrb[0].mxu0 %v665
  %v752 = vpop.f32.mrb[0].mxu0
  %v753 = vadd.f32 %v632, %v752
  %v754 = vpop.f32.mrb[0].mxu0
  %v755 = vpop.f32.mrb[0].mxu0
  %v756 = vadd.f32 %v632, %v755
  %v757 = vpop.f32.mrb[0].mxu0
  %758 = vmatprep.mubr.bf16.mxu0 0
  %759 = vmatmul.mubr.bf16.gmra.mrb[0].mxu0 %v668
  %v760 = vpop.f32.mrb[0].mxu0
  %v761 = vadd.f32 %v632, %v760
  %v762 = vpop.f32.mrb[0].mxu0
  %v763 = vpop.f32.mrb[0].mxu0
  %v764 = vadd.f32 %v632, %v763
  %v765 = vpop.f32.mrb[0].mxu0
  %766 = vdwg.mxu0
  %v767 = vxor.u32 %v705, 2147483648
  %v768 = vxor.u32 %v708, 2147483648
  %v769 = vxor.u32 %v713, 2147483648
  %v770 = vxor.u32 %v716, 2147483648
  %v771 = vxor.u32 %v721, 2147483648
  %v772 = vxor.u32 %v724, 2147483648
  %v773 = vxor.u32 %v729, 2147483648
  %v774 = vxor.u32 %v732, 2147483648
  %v775 = vxor.u32 %v737, 2147483648
  %v776 = vxor.u32 %v740, 2147483648
  %v777 = vxor.u32 %v745, 2147483648
  %v778 = vxor.u32 %v748, 2147483648
  %v779 = vxor.u32 %v753, 2147483648
  %v780 = vxor.u32 %v756, 2147483648
  %v781 = vxor.u32 %v761, 2147483648
  %v782 = vxor.u32 %v764, 2147483648
  %v783 = vmul.f32 %v767, 1.442695
  %v784 = vpow.pop %v783
  %v785 = vmul.f32 %v768, 1.442695
  %v786 = vpow.pop %v785
  %v787 = vmul.f32 %v769, 1.442695
  %v788 = vpow.pop %v787
  %v789 = vmul.f32 %v770, 1.442695
  %v790 = vpow.pop %v789
  %v791 = vmul.f32 %v771, 1.442695
  %v792 = vpow.pop %v791
  %v793 = vmul.f32 %v772, 1.442695
  %v794 = vpow.pop %v793
  %v795 = vmul.f32 %v773, 1.442695
  %v796 = vpow.pop %v795
  %v797 = vmul.f32 %v774, 1.442695
  %v798 = vpow.pop %v797
  %v799 = vmul.f32 %v775, 1.442695
  %v800 = vpow.pop %v799
  %v801 = vmul.f32 %v776, 1.442695
  %v802 = vpow.pop %v801
  %v803 = vmul.f32 %v777, 1.442695
  %v804 = vpow.pop %v803
  %v805 = vmul.f32 %v778, 1.442695
  %v806 = vpow.pop %v805
  %v807 = vmul.f32 %v779, 1.442695
  %v808 = vpow.pop %v807
  %v809 = vmul.f32 %v780, 1.442695
  %v810 = vpow.pop %v809
  %v811 = vmul.f32 %v781, 1.442695
  %v812 = vpow.pop %v811
  %v813 = vmul.f32 %v782, 1.442695
  %v814 = vpow.pop %v813
  %v815 = vadd.f32 %v784, 1.0
  %v816 = vadd.f32 %v786, 1.0
  %v817 = vadd.f32 %v788, 1.0
  %v818 = vadd.f32 %v790, 1.0
  %v819 = vadd.f32 %v792, 1.0
  %v820 = vadd.f32 %v794, 1.0
  %v821 = vadd.f32 %v796, 1.0
  %v822 = vadd.f32 %v798, 1.0
  %v823 = vadd.f32 %v800, 1.0
  %v824 = vadd.f32 %v802, 1.0
  %v825 = vadd.f32 %v804, 1.0
  %v826 = vadd.f32 %v806, 1.0
  %v827 = vadd.f32 %v808, 1.0
  %v828 = vadd.f32 %v810, 1.0
  %v829 = vadd.f32 %v812, 1.0
  %v830 = vadd.f32 %v814, 1.0
  %v831 = vrcp.pop %v815
  %v832 = vmul.f32 1.0, %v831
  %v833 = vrcp.pop %v816
  %v834 = vmul.f32 1.0, %v833
  %v835 = vrcp.pop %v817
  %v836 = vmul.f32 1.0, %v835
  %v837 = vrcp.pop %v818
  %v838 = vmul.f32 1.0, %v837
  %v839 = vrcp.pop %v819
  %v840 = vmul.f32 1.0, %v839
  %v841 = vrcp.pop %v820
  %v842 = vmul.f32 1.0, %v841
  %v843 = vrcp.pop %v821
  %v844 = vmul.f32 1.0, %v843
  %v845 = vrcp.pop %v822
  %v846 = vmul.f32 1.0, %v845
  %v847 = vrcp.pop %v823
  %v848 = vmul.f32 1.0, %v847
  %v849 = vrcp.pop %v824
  %v850 = vmul.f32 1.0, %v849
  %v851 = vrcp.pop %v825
  %v852 = vmul.f32 1.0, %v851
  %v853 = vrcp.pop %v826
  %v854 = vmul.f32 1.0, %v853
  %v855 = vrcp.pop %v827
  %v856 = vmul.f32 1.0, %v855
  %v857 = vrcp.pop %v828
  %v858 = vmul.f32 1.0, %v857
  %v859 = vrcp.pop %v829
  %v860 = vmul.f32 1.0, %v859
  %v861 = vrcp.pop %v830
  %v862 = vmul.f32 1.0, %v861
  %vm863 = vcmask 7168
  %864 = vst.msk [vmem:[%s9] sm:$0xff] %vm863, %v832
  %865 = vst.msk [vmem:[%s9 + $0x8] sm:$0xff] %vm863, %v834
  %866 = vst.msk [vmem:[%s9 + $0x10] sm:$0xff] %vm863, %v836
  %867 = vst.msk [vmem:[%s9 + $0x18] sm:$0xff] %vm863, %v838
  %868 = vst.msk [vmem:[%s9 + $0x20] sm:$0xff] %vm863, %v840
  %869 = vst.msk [vmem:[%s9 + $0x28] sm:$0xff] %vm863, %v842
  %870 = vst.msk [vmem:[%s9 + $0x30] sm:$0xff] %vm863, %v844
  %871 = vst.msk [vmem:[%s9 + $0x38] sm:$0xff] %vm863, %v846
  %872 = vst.msk [vmem:[%s9 + $0x40] sm:$0xff] %vm863, %v848
  %873 = vst.msk [vmem:[%s9 + $0x48] sm:$0xff] %vm863, %v850
  %874 = vst.msk [vmem:[%s9 + $0x50] sm:$0xff] %vm863, %v852
  %875 = vst.msk [vmem:[%s9 + $0x58] sm:$0xff] %vm863, %v854
  %876 = vst.msk [vmem:[%s9 + $0x60] sm:$0xff] %vm863, %v856
  %877 = vst.msk [vmem:[%s9 + $0x68] sm:$0xff] %vm863, %v858
  %878 = vst.msk [vmem:[%s9 + $0x70] sm:$0xff] %vm863, %v860
  %879 = vst.msk [vmem:[%s9 + $0x78] sm:$0xff] %vm863, %v862
  // Predicated region
  $region38: #{tpu_custom_call.1} parent=0 // pred_check
    _
  $region39: #{tpu_custom_call.1} parent=0 // pred_check_branch
    %881 = sbr.rel (0) target = $region41
  $region40: #{tpu_custom_call.1} parent=0 // pred_region
    _
  $region41: #{tpu_custom_call.1} parent=0 // pred_fallthru
    _
  // Predicated region
  $region42: #{tpu_custom_call.1} parent=0 // pred_check
    _
  $region43: #{tpu_custom_call.1} parent=0 // pred_check_branch
    %883 = sbr.rel (0) target = $region45
  $region44: #{tpu_custom_call.1} parent=0 // pred_region
    _
  $region45: #{tpu_custom_call.1} parent=0 // pred_fallthru
    _

</llo_original>
